<compile_context>
chip_gen: v5e
topology: v5e:2x2
jax: 0.10.0
libtpu: 0.0.40
codegen_flags: <defaults>
</compile_context>

<pallas_src>
import functools

import jax
import jax.numpy as jnp
from jax.experimental import pallas as pl
from jax.experimental.pallas import tpu as pltpu

LN_EPS = 1e-5


def _layernorm_into(x_ref, ln_w_ref, ln_b_ref, xn_scr):
    """f32 LayerNorm of the current x tile, stored as bf16 MXU operand."""
    x = x_ref[...].astype(jnp.float32)
    mean = jnp.mean(x, axis=-1, keepdims=True)
    mean_sq = jnp.mean(x * x, axis=-1, keepdims=True)        # 2 XLU reductions
    var = jnp.maximum(mean_sq - mean * mean, 0.0)
    xn = (x - mean) * jax.lax.rsqrt(var + LN_EPS)
    xn = (xn * ln_w_ref[...].astype(jnp.float32)
          + ln_b_ref[...].astype(jnp.float32))
    xn_scr[...] = xn.astype(xn_scr.dtype)


def resmlp_kernel_single(x_ref, ln_w_ref, ln_b_ref, w1_ref, b1_ref, w2_ref,
                         b2_ref, o_ref, xn_scr):
    """1-D grid over row tiles; whole hidden dim in one shot."""
    _layernorm_into(x_ref, ln_w_ref, ln_b_ref, xn_scr)
    h = jnp.dot(xn_scr[...], w1_ref[...], preferred_element_type=jnp.float32)
    h = jnp.maximum(h + b1_ref[...].astype(jnp.float32), 0.0)
    y = jnp.dot(h.astype(w2_ref.dtype), w2_ref[...],
                preferred_element_type=jnp.float32)
    y = y + b2_ref[...].astype(jnp.float32)
    o_ref[...] = (x_ref[...].astype(jnp.float32) + y).astype(o_ref.dtype)


def resmlp_kernel_multi(x_ref, ln_w_ref, ln_b_ref, w1_ref, b1_ref, w2_ref,
                        b2_ref, o_ref, xn_scr, acc_scr):
    """Grid = (row_tiles, hidden_tiles); hidden axis is a reduction."""
    k = pl.program_id(1)

    # First hidden tile: LayerNorm once per row tile + init accumulator.
    @pl.when(k == 0)
    def _():
        _layernorm_into(x_ref, ln_w_ref, ln_b_ref, xn_scr)
        acc_scr[...] = jnp.zeros_like(acc_scr)

    # Linear1 chunk (F -> th) + ReLU, then Linear2 chunk (th -> F).
    h = jnp.dot(xn_scr[...], w1_ref[...], preferred_element_type=jnp.float32)
    h = jnp.maximum(h + b1_ref[...].astype(jnp.float32), 0.0)
    acc_scr[...] += jnp.dot(h.astype(w2_ref.dtype), w2_ref[...],
                            preferred_element_type=jnp.float32)

    # Last hidden tile: bias, residual, write out.
    @pl.when(k == pl.num_programs(1) - 1)
    def _():
        y = acc_scr[...] + b2_ref[...].astype(jnp.float32)
        o_ref[...] = (x_ref[...].astype(jnp.float32) + y).astype(o_ref.dtype)


def _round_up(x, m):
    return ((x + m - 1) // m) * m


def _pick_h_tile(F, H, preferred=512, weight_budget_bytes=8 * 1024 * 1024):
    """Hidden-dim tile size.

    Keep the whole hidden dim in one tile when both bf16 weight copies fit in
    a small VMEM budget (single fetch, single-buffered, no per-row-tile
    re-fetch).  Otherwise split H into the largest 128-multiple <= preferred.
    """
    if 2 * F * H * 2 <= weight_budget_bytes or H <= preferred:
        return H
    for cand in range(preferred, 127, -128):
        if H % cand == 0:
            return cand
    return H


@functools.partial(jax.jit, static_argnames=("tm", "th"))
def resmlp_forward(x, ln_w, ln_b, w1, b1, w2, b2, *, tm=256, th=None):
    """x: (..., F). Returns same shape/dtype as x."""
    orig_shape = x.shape
    F = orig_shape[-1]
    H = w1.shape[1]
    x2d = x.reshape(-1, F)
    rows = x2d.shape[0]

    # Effective row tile: as large as requested, never larger than the
    # 8-aligned row count (tiny inputs need no padding at all).
    tm_eff = _round_up(min(tm, _round_up(rows, 8)), 8)
    rows_pad = _round_up(rows, tm_eff)
    if rows_pad != rows:
        # Ragged-tail fallback only; choose tm dividing rows to avoid it.
        x2d = jnp.pad(x2d, ((0, rows_pad - rows), (0, 0)))

    if th is None:
        th = _pick_h_tile(F, H)
    assert H % th == 0, "hidden tile must divide hidden dim"
    nkt = H // th
    n_row_tiles = rows_pad // tm_eff

    # Matmul operands in bf16 (accumulation stays f32 in-kernel).
    w1_bf = w1.astype(jnp.bfloat16)
    w2_bf = w2.astype(jnp.bfloat16)

    const_mode = pl.Buffered(1)  # grid-constant operands: single-buffered
    vmem_limit = 64 * 1024 * 1024
    args = (x2d, ln_w, ln_b, w1_bf, b1, w2_bf, b2)

    if nkt == 1:
        # Fast path: 1-D grid over row tiles, weights fully VMEM-resident.
        out2d = pl.pallas_call(
            resmlp_kernel_single,
            out_shape=jax.ShapeDtypeStruct((rows_pad, F), x.dtype),
            grid_spec=pltpu.PrefetchScalarGridSpec(
                num_scalar_prefetch=0,
                grid=(n_row_tiles,),
                in_specs=[
                    pl.BlockSpec((tm_eff, F), lambda i: (i, 0)),      # x tile
                    pl.BlockSpec((1, F), lambda i: (0, 0),
                                 pipeline_mode=const_mode),           # ln w
                    pl.BlockSpec((1, F), lambda i: (0, 0),
                                 pipeline_mode=const_mode),           # ln b
                    pl.BlockSpec((F, H), lambda i: (0, 0),
                                 pipeline_mode=const_mode),           # W1
                    pl.BlockSpec((1, H), lambda i: (0, 0),
                                 pipeline_mode=const_mode),           # b1
                    pl.BlockSpec((H, F), lambda i: (0, 0),
                                 pipeline_mode=const_mode),           # W2
                    pl.BlockSpec((1, F), lambda i: (0, 0),
                                 pipeline_mode=const_mode),           # b2
                ],
                out_specs=pl.BlockSpec((tm_eff, F), lambda i: (i, 0)),
                scratch_shapes=[
                    pltpu.VMEM((tm_eff, F), jnp.bfloat16),  # LayerNorm(x)
                ],
            ),
            compiler_params=pltpu.CompilerParams(
                dimension_semantics=("parallel",),
                vmem_limit_bytes=vmem_limit,
            ),
        )(*args)
    else:
        # Big-H path: tile the hidden dim, accumulate into resident f32.
        out2d = pl.pallas_call(
            resmlp_kernel_multi,
            out_shape=jax.ShapeDtypeStruct((rows_pad, F), x.dtype),
            grid_spec=pltpu.PrefetchScalarGridSpec(
                num_scalar_prefetch=0,
                grid=(n_row_tiles, nkt),
                in_specs=[
                    pl.BlockSpec((tm_eff, F), lambda i, k: (i, 0)),   # x tile
                    pl.BlockSpec((1, F), lambda i, k: (0, 0),
                                 pipeline_mode=const_mode),           # ln w
                    pl.BlockSpec((1, F), lambda i, k: (0, 0),
                                 pipeline_mode=const_mode),           # ln b
                    pl.BlockSpec((F, th), lambda i, k: (0, k)),       # W1 chunk
                    pl.BlockSpec((1, th), lambda i, k: (0, k)),       # b1 chunk
                    pl.BlockSpec((th, F), lambda i, k: (k, 0)),       # W2 chunk
                    pl.BlockSpec((1, F), lambda i, k: (0, 0),
                                 pipeline_mode=const_mode),           # b2
                ],
                out_specs=pl.BlockSpec((tm_eff, F), lambda i, k: (i, 0)),
                scratch_shapes=[
                    pltpu.VMEM((tm_eff, F), jnp.bfloat16),  # LayerNorm(x)
                    pltpu.VMEM((tm_eff, F), jnp.float32),   # f32 accumulator
                ],
            ),
            compiler_params=pltpu.CompilerParams(
                dimension_semantics=("parallel", "arbitrary"),
                vmem_limit_bytes=vmem_limit,
            ),
        )(*args)

    if rows_pad != rows:
        out2d = out2d[:rows]
    return out2d.reshape(orig_shape)


def init_resmlp_params(key, infeatures, hidden_dim=None, dtype=jnp.float32):
    """Deterministic synthetic init mirroring the PyTorch module's shapes."""
    if hidden_dim is None:
        hidden_dim = infeatures
    k1, k2, k3, k4 = jax.random.split(key, 4)
    # LayerNorm: weight=1, bias=0 (PyTorch default)
    ln_w = jnp.ones((1, infeatures), dtype)
    ln_b = jnp.zeros((1, infeatures), dtype)
    # Linear layers: uniform(-1/sqrt(fan_in), 1/sqrt(fan_in)) like PyTorch
    bound1 = 1.0 / (infeatures ** 0.5)
    w1 = jax.random.uniform(k1, (infeatures, hidden_dim), dtype,
                            -bound1, bound1)   # stored transposed (F, H)
    b1 = jax.random.uniform(k2, (1, hidden_dim), dtype, -bound1, bound1)
    bound2 = 1.0 / (hidden_dim ** 0.5)
    w2 = jax.random.uniform(k3, (hidden_dim, infeatures), dtype,
                            -bound2, bound2)   # stored transposed (H, F)
    b2 = jax.random.uniform(k4, (1, infeatures), dtype, -bound2, bound2)
    return ln_w, ln_b, w1, b1, w2, b2


def resmlp_reference(x, ln_w, ln_b, w1, b1, w2, b2):
    """Pure-JAX f32 reference for correctness checking."""
    xf = x.astype(jnp.float32)
    mean = jnp.mean(xf, axis=-1, keepdims=True)
    var = jnp.mean((xf - mean) ** 2, axis=-1, keepdims=True)
    xn = (xf - mean) / jnp.sqrt(var + LN_EPS)
    xn = xn * ln_w[0] + ln_b[0]
    h = jnp.maximum(xn @ w1 + b1[0], 0.0)
    y = h @ w2 + b2[0]
    return (xf + y).astype(x.dtype)


def _check(x, params, **kwargs):
    out = jax.block_until_ready(resmlp_forward(x, *params, **kwargs))
    ref = resmlp_reference(x, *params)
    assert out.shape == x.shape and out.dtype == x.dtype
    # bf16 MXU operands -> compare to the f32 reference with a bf16-level tol.
    assert jnp.allclose(out, ref, atol=2e-2, rtol=2e-2), "mismatch vs reference"


if __name__ == "__main__":
    key = jax.random.PRNGKey(0)
    kx1, kp1, kx2, kp2 = jax.random.split(key, 4)

    # small case: batch=2, seq=8, infeatures=128, hidden=128
    # -> single-hidden-tile fast path, 1-D grid.
    B, S, F = 2, 8, 128
    x_small = jax.random.normal(kx1, (B, S, F), jnp.float32)
    params_small = init_resmlp_params(kp1, F, hidden_dim=F)
    _check(x_small, params_small, tm=256)

    # tiled case: exercises multiple row tiles and the hidden-dim reduction
    # axis (rows=512 -> 2 row tiles of 256; H=1024, th=512 -> 2 hidden tiles).
    B2, S2, F2, H2 = 2, 256, 256, 1024
    x_big = jax.random.normal(kx2, (B2, S2, F2), jnp.float32)
    params_big = init_resmlp_params(kp2, F2, hidden_dim=H2)
    _check(x_big, params_big, tm=256, th=512)

    print("KERNEL_OK")
</pallas_src>

<mosaic_0001>
module attributes {stable_mosaic.version = 11 : i64} {
  func.func @resmlp_kernel_single(%arg0: i32, %arg1: memref<16x128xf32, #tpu.memory_space<vmem>>, %arg2: memref<1x128xf32, #tpu.memory_space<vmem>>, %arg3: memref<1x128xf32, #tpu.memory_space<vmem>>, %arg4: memref<128x128xbf16, #tpu.memory_space<vmem>>, %arg5: memref<1x128xf32, #tpu.memory_space<vmem>>, %arg6: memref<128x128xbf16, #tpu.memory_space<vmem>>, %arg7: memref<1x128xf32, #tpu.memory_space<vmem>>, %arg8: memref<16x128xf32, #tpu.memory_space<vmem>>, %arg9: memref<16x128xbf16, #tpu.memory_space<vmem>>) attributes {dimension_semantics = [#tpu.dimension_semantics<parallel>], iteration_bounds = array<i64: 1>, scalar_prefetch = 0 : i64, scratch_operands = 1 : i64, tpu.core_type = #tpu.core_type<tc>, window_params = [{transform_indices = @transform_0, window_bounds = array<i64: 16, 128>}, {pipeline_mode = #tpu.pipeline_mode<synchronous>, transform_indices = @transform_1, window_bounds = array<i64: 1, 128>}, {pipeline_mode = #tpu.pipeline_mode<synchronous>, transform_indices = @transform_2, window_bounds = array<i64: 1, 128>}, {pipeline_mode = #tpu.pipeline_mode<synchronous>, transform_indices = @transform_3, window_bounds = array<i64: 128, 128>}, {pipeline_mode = #tpu.pipeline_mode<synchronous>, transform_indices = @transform_4, window_bounds = array<i64: 1, 128>}, {pipeline_mode = #tpu.pipeline_mode<synchronous>, transform_indices = @transform_5, window_bounds = array<i64: 128, 128>}, {pipeline_mode = #tpu.pipeline_mode<synchronous>, transform_indices = @transform_6, window_bounds = array<i64: 1, 128>}, {transform_indices = @transform_7, window_bounds = array<i64: 16, 128>}]} {
    %c0 = arith.constant 0 : index
    %c0_0 = arith.constant 0 : index
    %0 = vector.load %arg1[%c0, %c0_0] : memref<16x128xf32, #tpu.memory_space<vmem>>, vector<16x128xf32>
    %cst = arith.constant dense<0.000000e+00> : vector<16xf32>
    %1 = vector.multi_reduction <add>, %0, %cst [1] : vector<16x128xf32> to vector<16xf32>
    %2 = vector.shape_cast %1 : vector<16xf32> to vector<16x1xf32>
    %cst_1 = arith.constant 1.280000e+02 : f32
    %3 = vector.broadcast %cst_1 : f32 to vector<16x1xf32>
    %4 = arith.divf %2, %3 : vector<16x1xf32>
    %5 = arith.mulf %0, %0 : vector<16x128xf32>
    %cst_2 = arith.constant dense<0.000000e+00> : vector<16xf32>
    %6 = vector.multi_reduction <add>, %5, %cst_2 [1] : vector<16x128xf32> to vector<16xf32>
    %7 = vector.shape_cast %6 : vector<16xf32> to vector<16x1xf32>
    %cst_3 = arith.constant 1.280000e+02 : f32
    %8 = vector.broadcast %cst_3 : f32 to vector<16x1xf32>
    %9 = arith.divf %7, %8 : vector<16x1xf32>
    %10 = arith.mulf %4, %4 : vector<16x1xf32>
    %11 = arith.subf %9, %10 : vector<16x1xf32>
    %cst_4 = arith.constant 0.000000e+00 : f32
    %12 = vector.broadcast %cst_4 : f32 to vector<16x1xf32>
    %13 = arith.maximumf %11, %12 : vector<16x1xf32>
    %14 = vector.broadcast %4 : vector<16x1xf32> to vector<16x128xf32>
    %15 = arith.subf %0, %14 : vector<16x128xf32>
    %cst_5 = arith.constant 9.99999974E-6 : f32
    %16 = vector.broadcast %cst_5 : f32 to vector<16x1xf32>
    %17 = arith.addf %13, %16 : vector<16x1xf32>
    %18 = math.rsqrt %17 : vector<16x1xf32>
    %19 = vector.broadcast %18 : vector<16x1xf32> to vector<16x128xf32>
    %20 = arith.mulf %15, %19 : vector<16x128xf32>
    %c0_6 = arith.constant 0 : index
    %c0_7 = arith.constant 0 : index
    %21 = vector.load %arg2[%c0_6, %c0_7] : memref<1x128xf32, #tpu.memory_space<vmem>>, vector<1x128xf32>
    %22 = vector.broadcast %21 : vector<1x128xf32> to vector<16x128xf32>
    %23 = arith.mulf %20, %22 : vector<16x128xf32>
    %c0_8 = arith.constant 0 : index
    %c0_9 = arith.constant 0 : index
    %24 = vector.load %arg3[%c0_8, %c0_9] : memref<1x128xf32, #tpu.memory_space<vmem>>, vector<1x128xf32>
    %25 = vector.broadcast %24 : vector<1x128xf32> to vector<16x128xf32>
    %26 = arith.addf %23, %25 : vector<16x128xf32>
    %27 = arith.truncf %26 : vector<16x128xf32> to vector<16x128xbf16>
    %c0_10 = arith.constant 0 : index
    %c0_11 = arith.constant 0 : index
    %28 = vector.load %arg9[%c0_10, %c0_11] : memref<16x128xbf16, #tpu.memory_space<vmem>>, vector<16x128xbf16>
    tpu.vector_store %arg9[%c0_10, %c0_11], %27 {strides = array<i32>} : memref<16x128xbf16, #tpu.memory_space<vmem>>, vector<16x128xbf16>,
    %c0_12 = arith.constant 0 : index
    %c0_13 = arith.constant 0 : index
    %29 = vector.load %arg9[%c0_12, %c0_13] : memref<16x128xbf16, #tpu.memory_space<vmem>>, vector<16x128xbf16>
    %c0_14 = arith.constant 0 : index
    %c0_15 = arith.constant 0 : index
    %30 = vector.load %arg4[%c0_14, %c0_15] : memref<128x128xbf16, #tpu.memory_space<vmem>>, vector<128x128xbf16>
    %cst_16 = arith.constant dense<0.000000e+00> : vector<16x128xf32>
    %31 = tpu.matmul %29, %30, %cst_16 {dimension_numbers = #tpu.dot_dimension_numbers<[1], [0], [0], [1], [0, 0, 1, 1], [], []>} : vector<16x128xbf16>, vector<128x128xbf16>, vector<16x128xf32> -> vector<16x128xf32>
    %c0_17 = arith.constant 0 : index
    %c0_18 = arith.constant 0 : index
    %32 = vector.load %arg5[%c0_17, %c0_18] : memref<1x128xf32, #tpu.memory_space<vmem>>, vector<1x128xf32>
    %33 = vector.broadcast %32 : vector<1x128xf32> to vector<16x128xf32>
    %34 = arith.addf %31, %33 : vector<16x128xf32>
    %cst_19 = arith.constant 0.000000e+00 : f32
    %35 = vector.broadcast %cst_19 : f32 to vector<16x128xf32>
    %36 = arith.maximumf %34, %35 : vector<16x128xf32>
    %37 = arith.truncf %36 : vector<16x128xf32> to vector<16x128xbf16>
    %c0_20 = arith.constant 0 : index
    %c0_21 = arith.constant 0 : index
    %38 = vector.load %arg6[%c0_20, %c0_21] : memref<128x128xbf16, #tpu.memory_space<vmem>>, vector<128x128xbf16>
    %cst_22 = arith.constant dense<0.000000e+00> : vector<16x128xf32>
    %39 = tpu.matmul %37, %38, %cst_22 {dimension_numbers = #tpu.dot_dimension_numbers<[1], [0], [0], [1], [0, 0, 1, 1], [], []>} : vector<16x128xbf16>, vector<128x128xbf16>, vector<16x128xf32> -> vector<16x128xf32>
    %c0_23 = arith.constant 0 : index
    %c0_24 = arith.constant 0 : index
    %40 = vector.load %arg7[%c0_23, %c0_24] : memref<1x128xf32, #tpu.memory_space<vmem>>, vector<1x128xf32>
    %41 = vector.broadcast %40 : vector<1x128xf32> to vector<16x128xf32>
    %42 = arith.addf %39, %41 : vector<16x128xf32>
    %c0_25 = arith.constant 0 : index
    %c0_26 = arith.constant 0 : index
    %43 = vector.load %arg1[%c0_25, %c0_26] : memref<16x128xf32, #tpu.memory_space<vmem>>, vector<16x128xf32>
    %44 = arith.addf %43, %42 : vector<16x128xf32>
    %c0_27 = arith.constant 0 : index
    %c0_28 = arith.constant 0 : index
    %45 = vector.load %arg8[%c0_27, %c0_28] : memref<16x128xf32, #tpu.memory_space<vmem>>, vector<16x128xf32>
    tpu.vector_store %arg8[%c0_27, %c0_28], %44 {strides = array<i32>} : memref<16x128xf32, #tpu.memory_space<vmem>>, vector<16x128xf32>,
    return
  }
  func.func @transform_0(%arg0: i32) -> (i32, i32) {
    %c0_i32 = arith.constant 0 : i32
    %c0_i32_0 = arith.constant 0 : i32
    return %arg0, %c0_i32 : i32, i32
  }
  func.func @transform_1(%arg0: i32) -> (i32, i32) {
    %c0_i32 = arith.constant 0 : i32
    %c0_i32_0 = arith.constant 0 : i32
    %c0_i32_1 = arith.constant 0 : i32
    return %c0_i32, %c0_i32_0 : i32, i32
  }
  func.func @transform_2(%arg0: i32) -> (i32, i32) {
    %c0_i32 = arith.constant 0 : i32
    %c0_i32_0 = arith.constant 0 : i32
    %c0_i32_1 = arith.constant 0 : i32
    return %c0_i32, %c0_i32_0 : i32, i32
  }
  func.func @transform_3(%arg0: i32) -> (i32, i32) {
    %c0_i32 = arith.constant 0 : i32
    %c0_i32_0 = arith.constant 0 : i32
    %c0_i32_1 = arith.constant 0 : i32
    return %c0_i32, %c0_i32_0 : i32, i32
  }
  func.func @transform_4(%arg0: i32) -> (i32, i32) {
    %c0_i32 = arith.constant 0 : i32
    %c0_i32_0 = arith.constant 0 : i32
    %c0_i32_1 = arith.constant 0 : i32
    return %c0_i32, %c0_i32_0 : i32, i32
  }
  func.func @transform_5(%arg0: i32) -> (i32, i32) {
    %c0_i32 = arith.constant 0 : i32
    %c0_i32_0 = arith.constant 0 : i32
    %c0_i32_1 = arith.constant 0 : i32
    return %c0_i32, %c0_i32_0 : i32, i32
  }
  func.func @transform_6(%arg0: i32) -> (i32, i32) {
    %c0_i32 = arith.constant 0 : i32
    %c0_i32_0 = arith.constant 0 : i32
    %c0_i32_1 = arith.constant 0 : i32
    return %c0_i32, %c0_i32_0 : i32, i32
  }
  func.func @transform_7(%arg0: i32) -> (i32, i32) {
    %c0_i32 = arith.constant 0 : i32
    %c0_i32_0 = arith.constant 0 : i32
    return %arg0, %c0_i32 : i32, i32
  }
}

</mosaic_0001>

<llo_original>
// kernel: resmlp_forward.1
$region0: #{resmlp_forward.1}
  #allocation0 [shape = 'u32[]', space=smem, size = 0x4, offset = 0x4, fixed_abs, tag = 'smem constant byte address 0x4 - core index']
  #allocation1 [shape = 'u32[72,128]{1,0:T(1,128)}', space=vmem, size = 0x9000, scoped, tag = 'internal scratch']
  #allocation2 [shape = 'bf16[16,128]{1,0:T(8,128)(2,1)}', space=vmem, size = 0x1000, scoped, tag = 'scratch operand']
  %s0 = inlined_call_operand.vmem [shape: f32[16,128], index: 0, kind: input, shape index: {}]
  %s1 = inlined_call_operand.vmem [shape: f32[1,128], index: 1, kind: input, shape index: {}]
  %s2 = inlined_call_operand.vmem [shape: f32[1,128], index: 2, kind: input, shape index: {}]
  %s3 = inlined_call_operand.vmem [shape: bf16[128,128], index: 3, kind: input, shape index: {}]
  %s4 = inlined_call_operand.vmem [shape: f32[1,128], index: 4, kind: input, shape index: {}]
  %s5 = inlined_call_operand.vmem [shape: bf16[128,128], index: 5, kind: input, shape index: {}]
  %s6 = inlined_call_operand.vmem [shape: f32[1,128], index: 6, kind: input, shape index: {}]
  %s7 = inlined_call_operand.hbm [shape: f32[16,128], index: 7, kind: output, shape index: {}]
  %s8 = sld [smem:[#allocation0]]
  $region38: #{resmlp_forward.1} parent=0
    _
  %s10 = ssub.s32 1, %s8
  %s11 = scalar_select 0, %s10, %s8
  $region1: #{resmlp_forward.1} parent=0
    #allocation3 [shape = 'u8[8192]{0}', space=vmem, size = 0x2000, scoped, tag = 'output window, operand 0, single buffered']
    #allocation4 [shape = 's32[1]{0}', space=sflag, size = 0x4, scoped, tag = 'scoped memory for resmlp_forward.1']
    %12 = vsyncpa [#allocation4], 0
    // Predicated region
    $region2: #{resmlp_forward.1} parent=1 // pred_check
      _
    $region3: #{resmlp_forward.1} parent=1 // pred_check_branch
      %14 = sbr.rel (0) target = $region5
    $region4: #{resmlp_forward.1} parent=1 // pred_region
      _
    $region5: #{resmlp_forward.1} parent=1 // pred_fallthru
      _
    // Predicated region
    $region6: #{resmlp_forward.1} parent=1 // pred_check
      _
    $region7: #{resmlp_forward.1} parent=1 // pred_check_branch
      %16 = sbr.rel (0) target = $region9
    $region8: #{resmlp_forward.1} parent=1 // pred_region
      _
    $region9: #{resmlp_forward.1} parent=1 // pred_fallthru
      _
    // Predicated region
    $region10: #{resmlp_forward.1} parent=1 // pred_check
      _
    $region11: #{resmlp_forward.1} parent=1 // pred_check_branch
      %18 = sbr.rel (0) target = $region13
    $region12: #{resmlp_forward.1} parent=1 // pred_region
      _
    $region13: #{resmlp_forward.1} parent=1 // pred_fallthru
      _
    // Predicated region
    $region14: #{resmlp_forward.1} parent=1 // pred_check
      _
    $region15: #{resmlp_forward.1} parent=1 // pred_check_branch
      %20 = sbr.rel (0) target = $region17
    $region16: #{resmlp_forward.1} parent=1 // pred_region
      _
    $region17: #{resmlp_forward.1} parent=1 // pred_fallthru
      _
    // Predicated region
    $region18: #{resmlp_forward.1} parent=1 // pred_check
      _
    $region19: #{resmlp_forward.1} parent=1 // pred_check_branch
      %22 = sbr.rel (0) target = $region21
    $region20: #{resmlp_forward.1} parent=1 // pred_region
      _
    $region21: #{resmlp_forward.1} parent=1 // pred_fallthru
      _
    // Predicated region
    $region22: #{resmlp_forward.1} parent=1 // pred_check
      _
    $region23: #{resmlp_forward.1} parent=1 // pred_check_branch
      %24 = sbr.rel (0) target = $region25
    $region24: #{resmlp_forward.1} parent=1 // pred_region
      _
    $region25: #{resmlp_forward.1} parent=1 // pred_fallthru
      _
    // Predicated region
    $region26: #{resmlp_forward.1} parent=1 // pred_check
      _
    $region27: #{resmlp_forward.1} parent=1 // pred_check_branch
      %26 = sbr.rel (0) target = $region29
    $region28: #{resmlp_forward.1} parent=1 // pred_region
      _
    $region29: #{resmlp_forward.1} parent=1 // pred_fallthru
      _
    %v27 = vld [vmem:[%s0] sm:$0xff]
    %v28 = vld [vmem:[%s0 + $0x8] sm:$0xff]
    %29 = vadd.xlane.f32.xlu0 %v27
    %v30 = vpop.xlane.xlu0 %29
    %31 = vadd.xlane.f32.xlu0 %v28
    %v32 = vpop.xlane.xlu0 %31
    %v33 = vrcp.pop 128.0
    %v34 = vmul.f32 128.0, %v33
    %v35 = vsub.f32 1.0, %v34
    %v36 = vmul.f32 %v33, %v35
    %v37 = vadd.f32 %v33, %v36
    %vm38 = vweird.f32 %v33
    %v39 = vsel %vm38, %v33, %v37
    %v40 = vmul.f32 %v30, %v39
    %v41 = vmul.f32 %v32, %v39
    %v42 = vmul.f32 %v27, %v27
    %v43 = vmul.f32 %v28, %v28
    %44 = vadd.xlane.f32.xlu0 %v42
    %v45 = vpop.xlane.xlu0 %44
    %46 = vadd.xlane.f32.xlu0 %v43
    %v47 = vpop.xlane.xlu0 %46
    %v48 = vmul.f32 %v45, %v39
    %v49 = vmul.f32 %v47, %v39
    %v50 = vmul.f32 %v40, %v40
    %v51 = vmul.f32 %v41, %v41
    %v52 = vsub.f32 %v48, %v50
    %v53 = vsub.f32 %v49, %v51
    %v54 = vmax.f32 %v52, 0.0
    %v55 = vmax.f32 %v53, 0.0
    %v56 = vsub.f32 %v27, %v40
    %v57 = vsub.f32 %v28, %v41
    %v58 = vadd.f32 %v54, 1e-05
    %v59 = vadd.f32 %v55, 1e-05
    %v60 = vrsqrt.pop %v58
    %v61 = vmul.f32 %v60, %v58
    %v62 = vmul.f32 %v61, %v60
    %v63 = vmul.f32 0.5, %v62
    %v64 = vsub.f32 1.5, %v63
    %v65 = vmul.f32 %v60, %v64
    %vm66 = vweird.f32 %v58
    %vm67 = vweird.f32 %v60
    %vm68 = vmor %vm66, %vm67
    %v69 = vsel %vm68, %v60, %v65
    %v70 = vrsqrt.pop %v59
    %v71 = vmul.f32 %v70, %v59
    %v72 = vmul.f32 %v71, %v70
    %v73 = vmul.f32 0.5, %v72
    %v74 = vsub.f32 1.5, %v73
    %v75 = vmul.f32 %v70, %v74
    %vm76 = vweird.f32 %v59
    %vm77 = vweird.f32 %v70
    %vm78 = vmor %vm76, %vm77
    %v79 = vsel %vm78, %v70, %v75
    %v80 = vmul.f32 %v56, %v69
    %v81 = vmul.f32 %v57, %v79
    %v82 = vld [vmem:[%s1] sm:$0x1]
    %v84 = vperm.slane %v82, 0
    %v86 = vmul.f32 %v80, %v84
    %v87 = vmul.f32 %v81, %v84
    %v88 = vld [vmem:[%s2] sm:$0x1]
    %v90 = vperm.slane %v88, 0
    %v92 = vadd.f32 %v86, %v90
    %v93 = vadd.f32 %v87, %v90
    %v94 = vpack.c.bf16 %v92, %v92
    %v95 = vpack.c.bf16 %v93, %v93
    %96 = vst [vmem:[#allocation2] sm:$0xf] %v94
    %97 = vst [vmem:[#allocation2 + $0x4] sm:$0xf] %v95
    %v98 = vld [vmem:[#allocation2] sm:$0xf]
    %v99 = vld [vmem:[#allocation2 + $0x4] sm:$0xf]
    %v100 = vld [vmem:[%s3] sm:$0xf]
    %v101 = vld [vmem:[%s3 + $0x4] sm:$0xf]
    %v102 = vld [vmem:[%s3 + $0x8] sm:$0xf]
    %v103 = vld [vmem:[%s3 + $0xc] sm:$0xf]
    %v104 = vld [vmem:[%s3 + $0x10] sm:$0xf]
    %v105 = vld [vmem:[%s3 + $0x14] sm:$0xf]
    %v106 = vld [vmem:[%s3 + $0x18] sm:$0xf]
    %v107 = vld [vmem:[%s3 + $0x1c] sm:$0xf]
    %v108 = vld [vmem:[%s3 + $0x20] sm:$0xf]
    %v109 = vld [vmem:[%s3 + $0x24] sm:$0xf]
    %v110 = vld [vmem:[%s3 + $0x28] sm:$0xf]
    %v111 = vld [vmem:[%s3 + $0x2c] sm:$0xf]
    %v112 = vld [vmem:[%s3 + $0x30] sm:$0xf]
    %v113 = vld [vmem:[%s3 + $0x34] sm:$0xf]
    %v114 = vld [vmem:[%s3 + $0x38] sm:$0xf]
    %v115 = vld [vmem:[%s3 + $0x3c] sm:$0xf]
    %v116 = vld [vmem:[%s4] sm:$0x1]
    %v118 = vperm.slane %v116, 0
    %v122 = vunpack.c.l.b16 %v98
    %v123 = vunpack.c.l.b16 %v99
    %v124 = vpack.c.b16 %v123, %v122
    %v142 = vunpack.c.l.b16 %v100
    %v143 = vunpack.c.l.b16 %v101
    %v144 = vunpack.c.l.b16 %v102
    %v145 = vunpack.c.l.b16 %v103
    %v146 = vunpack.c.l.b16 %v104
    %v147 = vunpack.c.l.b16 %v105
    %v148 = vunpack.c.l.b16 %v106
    %v149 = vunpack.c.l.b16 %v107
    %v150 = vunpack.c.l.b16 %v108
    %v151 = vunpack.c.l.b16 %v109
    %v152 = vunpack.c.l.b16 %v110
    %v153 = vunpack.c.l.b16 %v111
    %v154 = vunpack.c.l.b16 %v112
    %v155 = vunpack.c.l.b16 %v113
    %v156 = vunpack.c.l.b16 %v114
    %v157 = vunpack.c.l.b16 %v115
    %v158 = vpack.c.b16 %v143, %v142
    %v159 = vpack.c.b16 %v145, %v144
    %v160 = vpack.c.b16 %v147, %v146
    %v161 = vpack.c.b16 %v149, %v148
    %v162 = vpack.c.b16 %v151, %v150
    %v163 = vpack.c.b16 %v153, %v152
    %v164 = vpack.c.b16 %v155, %v154
    %v165 = vpack.c.b16 %v157, %v156
    %174 = vmatpush.bf16.msra.mxu0 %v165
    %175 = vmatpush.bf16.msra.mxu0 %v164
    %176 = vmatpush.bf16.msra.mxu0 %v163
    %177 = vmatpush.bf16.msra.mxu0 %v162
    %178 = vmatpush.bf16.msra.mxu0 %v161
    %179 = vmatpush.bf16.msra.mxu0 %v160
    %180 = vmatpush.bf16.msra.mxu0 %v159
    %181 = vmatpush.bf16.msra.mxu0 %v158
    %182 = vmatmul.bf16.gmra.mxu0 %v124
    %v183 = vpop.f32.mrf.mxu0
    %v184 = vadd.f32 %v118, %v183
    %v185 = vpop.f32.mrf.mxu0
    %v186 = vadd.f32 %v118, %v185
    %187 = vdwg.mxu0
    %v188 = vmax.f32 %v184, 0.0
    %v189 = vmax.f32 %v186, 0.0
    %v190 = vpack.c.bf16 %v189, %v188
    %v191 = vld [vmem:[%s5] sm:$0xf]
    %v192 = vld [vmem:[%s5 + $0x4] sm:$0xf]
    %v193 = vld [vmem:[%s5 + $0x8] sm:$0xf]
    %v194 = vld [vmem:[%s5 + $0xc] sm:$0xf]
    %v195 = vld [vmem:[%s5 + $0x10] sm:$0xf]
    %v196 = vld [vmem:[%s5 + $0x14] sm:$0xf]
    %v197 = vld [vmem:[%s5 + $0x18] sm:$0xf]
    %v198 = vld [vmem:[%s5 + $0x1c] sm:$0xf]
    %v199 = vld [vmem:[%s5 + $0x20] sm:$0xf]
    %v200 = vld [vmem:[%s5 + $0x24] sm:$0xf]
    %v201 = vld [vmem:[%s5 + $0x28] sm:$0xf]
    %v202 = vld [vmem:[%s5 + $0x2c] sm:$0xf]
    %v203 = vld [vmem:[%s5 + $0x30] sm:$0xf]
    %v204 = vld [vmem:[%s5 + $0x34] sm:$0xf]
    %v205 = vld [vmem:[%s5 + $0x38] sm:$0xf]
    %v206 = vld [vmem:[%s5 + $0x3c] sm:$0xf]
    %v207 = vld [vmem:[%s6] sm:$0x1]
    %v209 = vperm.slane %v207, 0
    %v227 = vunpack.c.l.b16 %v191
    %v228 = vunpack.c.l.b16 %v192
    %v229 = vunpack.c.l.b16 %v193
    %v230 = vunpack.c.l.b16 %v194
    %v231 = vunpack.c.l.b16 %v195
    %v232 = vunpack.c.l.b16 %v196
    %v233 = vunpack.c.l.b16 %v197
    %v234 = vunpack.c.l.b16 %v198
    %v235 = vunpack.c.l.b16 %v199
    %v236 = vunpack.c.l.b16 %v200
    %v237 = vunpack.c.l.b16 %v201
    %v238 = vunpack.c.l.b16 %v202
    %v239 = vunpack.c.l.b16 %v203
    %v240 = vunpack.c.l.b16 %v204
    %v241 = vunpack.c.l.b16 %v205
    %v242 = vunpack.c.l.b16 %v206
    %v243 = vpack.c.b16 %v228, %v227
    %v244 = vpack.c.b16 %v230, %v229
    %v245 = vpack.c.b16 %v232, %v231
    %v246 = vpack.c.b16 %v234, %v233
    %v247 = vpack.c.b16 %v236, %v235
    %v248 = vpack.c.b16 %v238, %v237
    %v249 = vpack.c.b16 %v240, %v239
    %v250 = vpack.c.b16 %v242, %v241
    %259 = vmatpush.bf16.msra.mxu0 %v250
    %260 = vmatpush.bf16.msra.mxu0 %v249
    %261 = vmatpush.bf16.msra.mxu0 %v248
    %262 = vmatpush.bf16.msra.mxu0 %v247
    %263 = vmatpush.bf16.msra.mxu0 %v246
    %264 = vmatpush.bf16.msra.mxu0 %v245
    %265 = vmatpush.bf16.msra.mxu0 %v244
    %266 = vmatpush.bf16.msra.mxu0 %v243
    %267 = vmatmul.bf16.gmra.mxu0 %v190
    %v268 = vpop.f32.mrf.mxu0
    %v269 = vadd.f32 %v209, %v268
    %v270 = vpop.f32.mrf.mxu0
    %v271 = vadd.f32 %v209, %v270
    %272 = vdwg.mxu0
    %v273 = vld [vmem:[%s0] sm:$0xff]
    %v274 = vld [vmem:[%s0 + $0x8] sm:$0xff]
    %v275 = vadd.f32 %v273, %v269
    %v276 = vadd.f32 %v274, %v271
    %277 = vst [vmem:[#allocation3] sm:$0xff] %v275
    %278 = vst [vmem:[#allocation3 + $0x8] sm:$0xff] %v276
    // Predicated region
    $region30: #{resmlp_forward.1} parent=1 // pred_check
      _
    $region31: #{resmlp_forward.1} parent=1 // pred_check_branch
      %280 = sbr.rel (0) target = $region33
    $region32: #{resmlp_forward.1} parent=1 // pred_region
      %282 = vsyncadd [#allocation4], 0
      %s283 = sshll.u32 [#allocation3], 4
      %s284 = int_to_ptr.vmem [resolvable:$true] %s283
      %s285 = sshll.u32 %s7, 4
      %s286 = int_to_ptr.hbm [resolvable:$true] %s285
      %291 = dma.vmem_to_hbm [thread:$0]  %s284, 256, %s286, [#allocation4], 128, 128, 8
    $region33: #{resmlp_forward.1} parent=1 // pred_fallthru
      _
    // Predicated region
    $region34: #{resmlp_forward.1} parent=1 // pred_check
      _
    $region35: #{resmlp_forward.1} parent=1 // pred_check_branch
      %293 = sbr.rel (0) target = $region37
    $region36: #{resmlp_forward.1} parent=1 // pred_region
      %295 = dma.done [#allocation4], 256
    $region37: #{resmlp_forward.1} parent=1 // pred_fallthru
      _
    %296 = vsyncpa [#allocation4], 1

</llo_original>
